<compile_context>
chip_gen: v7x
topology: tpu7x:2x2x1
jax: 0.10.0
libtpu: 0.0.40
codegen_flags: <defaults>
</compile_context>

<pallas_src>
import functools

import jax
import jax.numpy as jnp
from jax.experimental import pallas as pl
from jax.experimental.pallas import tpu as pltpu

BN_EPS = 1e-5


def _to_feature_map_kernel(z_ref, w_ref, b_ref, g_ref, beta_ref, o_ref):
    # z_ref:    (N, D)   full latent batch (resident every grid step), bf16/f32
    # w_ref:    (D, TN)  tile of the transposed Linear weight, bf16/f32
    # b_ref:    (1, TN)  Linear bias tile, f32
    # g_ref:    (1, TN)  BatchNorm gamma tile, f32
    # beta_ref: (1, TN)  BatchNorm beta tile, f32
    # o_ref:    (N, TN)  output tile, f32 (reshaped to NCHW in the wrapper)
    n = z_ref.shape[0]
    inv_n = jnp.float32(1.0 / n)

    y = jnp.dot(z_ref[...], w_ref[...], preferred_element_type=jnp.float32)
    y = y + b_ref[...]                      # broadcast (1, TN) over batch
    y = jnp.maximum(y, 0.0)                 # ReLU

    # BatchNorm1d (training): per-feature stats over the batch axis, in f32.
    mean = jnp.sum(y, axis=0, keepdims=True) * inv_n
    diff = y - mean
    var = jnp.sum(diff * diff, axis=0, keepdims=True) * inv_n   # biased variance
    scale = g_ref[...] * jax.lax.rsqrt(var + BN_EPS)            # fused affine, (1, TN)
    o_ref[...] = (diff * scale + beta_ref[...]).astype(o_ref.dtype)


def _choose_tile_n(out_dim):
    # Tiny outputs: one lane-dense tile, no per-grid-step overhead.
    if out_dim <= 512:
        return out_dim
    # Prefer 256-aligned tiles (full MXU width on v6e/v7x) dividing out_dim,
    # keeping >= 2 grid steps so v7x can shard the parallel axis over both TCs.
    for cand in (1024, 768, 512, 256):
        if out_dim % cand == 0 and out_dim // cand >= 2:
            return cand
    # Fall back to 128-aligned divisors, then the whole output.
    for cand in (896, 640, 384, 128):
        if out_dim % cand == 0:
            return cand
    return out_dim


@functools.partial(
    jax.jit,
    static_argnames=("num_channels", "feature_map_size", "tile_n", "compute_dtype"),
)
def to_feature_map(z, w_t, bias, gamma, beta, *, num_channels, feature_map_size,
                   tile_n=None, compute_dtype=jnp.bfloat16):
    N, D = z.shape
    out_dim = num_channels * feature_map_size * feature_map_size
    assert w_t.shape == (D, out_dim)

    if tile_n is None:
        tile_n = _choose_tile_n(out_dim)
    assert out_dim % tile_n == 0, "tile_n must divide C*F*F"
    grid = (out_dim // tile_n,)

    # bf16 matmul operands (HBM-bound weight stream), f32 epilogue params.
    z_c = z.astype(compute_dtype)
    w_c = w_t.astype(compute_dtype)
    b2 = bias.reshape(1, out_dim).astype(jnp.float32)
    g2 = gamma.reshape(1, out_dim).astype(jnp.float32)
    beta2 = beta.reshape(1, out_dim).astype(jnp.float32)

    # Explicit VMEM budget (v7x-safe): resident z + double-buffered W tile,
    # output tile and param tiles, with headroom.
    comp_bytes = jnp.dtype(compute_dtype).itemsize
    vmem_needed = (
        2 * N * D * comp_bytes          # z (constant block, counted double-buffered)
        + 2 * D * tile_n * comp_bytes   # W^T tile, double-buffered
        + 2 * N * tile_n * 4            # f32 output tile, double-buffered
        + 2 * 3 * tile_n * 4            # bias / gamma / beta tiles
    )
    vmem_limit = min(max(int(vmem_needed * 2), 16 * 1024 * 1024), 64 * 1024 * 1024)

    flat = pl.pallas_call(
        _to_feature_map_kernel,
        out_shape=jax.ShapeDtypeStruct((N, out_dim), jnp.float32),
        grid_spec=pltpu.PrefetchScalarGridSpec(
            num_scalar_prefetch=0,
            grid=grid,
            in_specs=[
                pl.BlockSpec((N, D), lambda j: (0, 0)),        # z (whole batch)
                pl.BlockSpec((D, tile_n), lambda j: (0, j)),   # W^T tile
                pl.BlockSpec((1, tile_n), lambda j: (0, j)),   # bias tile
                pl.BlockSpec((1, tile_n), lambda j: (0, j)),   # gamma tile
                pl.BlockSpec((1, tile_n), lambda j: (0, j)),   # beta tile
            ],
            out_specs=pl.BlockSpec((N, tile_n), lambda j: (0, j)),
        ),
        compiler_params=pltpu.CompilerParams(
            dimension_semantics=("parallel",),
            vmem_limit_bytes=vmem_limit,
        ),
    )(z_c, w_c, b2, g2, beta2)

    # nn.Unflatten(1, (C, F, F)) -> NCHW
    return flat.reshape(N, num_channels, feature_map_size, feature_map_size)


def _reference(z, w_t, bias, gamma, beta, num_channels, feature_map_size,
               compute_dtype=jnp.bfloat16):
    # Mirror the kernel's numerics: bf16 operands, f32 accumulation + f32 BN.
    y = jnp.dot(z.astype(compute_dtype), w_t.astype(compute_dtype),
                preferred_element_type=jnp.float32)
    y = y + bias.reshape(1, -1).astype(jnp.float32)
    y = jnp.maximum(y, 0.0)
    mean = jnp.mean(y, axis=0, keepdims=True)
    var = jnp.mean((y - mean) ** 2, axis=0, keepdims=True)
    y = (y - mean) * jax.lax.rsqrt(var + BN_EPS) * gamma.reshape(1, -1) \
        + beta.reshape(1, -1)
    return y.reshape(z.shape[0], num_channels, feature_map_size, feature_map_size)


if __name__ == "__main__":
    # Small shapes consistent with the module:
    #   latent z: (N, D) = (8, 32); feature_map_size F = 8; num_channels C = 4
    #   Linear: D -> C*F*F = 256
    N, D = 8, 32
    F, C = 8, 4
    OUT = C * F * F

    key = jax.random.PRNGKey(0)
    kz, kw, kb = jax.random.split(key, 3)

    z = jax.random.normal(kz, (N, D), dtype=jnp.float32)

    # PyTorch Linear default init: U(-1/sqrt(D), 1/sqrt(D)).
    bound = 1.0 / (D ** 0.5)
    w = jax.random.uniform(kw, (OUT, D), minval=-bound, maxval=bound, dtype=jnp.float32)
    bias = jax.random.uniform(kb, (OUT,), minval=-bound, maxval=bound, dtype=jnp.float32)
    w_t = w.T  # (D, OUT) layout for the kernel

    # BatchNorm1d affine params (fresh init: gamma=1, beta=0).
    gamma = jnp.ones((OUT,), dtype=jnp.float32)
    beta = jnp.zeros((OUT,), dtype=jnp.float32)

    out = to_feature_map(z, w_t, bias, gamma, beta,
                         num_channels=C, feature_map_size=F)
    out = jax.block_until_ready(out)

    ref = _reference(z, w_t, bias, gamma, beta, C, F)
    assert out.shape == (N, C, F, F), f"bad shape {out.shape}"
    assert jnp.allclose(out, ref, atol=2e-2, rtol=2e-2), "mismatch vs reference"

    print("KERNEL_OK")
</pallas_src>

<mosaic_0001>
module attributes {stable_mosaic.version = 11 : i64} {
  func.func @_to_feature_map_kernel(%arg0: i32, %arg1: memref<8x32xbf16, #tpu.memory_space<vmem>>, %arg2: memref<32x256xbf16, #tpu.memory_space<vmem>>, %arg3: memref<1x256xf32, #tpu.memory_space<vmem>>, %arg4: memref<1x256xf32, #tpu.memory_space<vmem>>, %arg5: memref<1x256xf32, #tpu.memory_space<vmem>>, %arg6: memref<8x256xf32, #tpu.memory_space<vmem>>) attributes {dimension_semantics = [#tpu.dimension_semantics<parallel>], iteration_bounds = array<i64: 1>, scalar_prefetch = 0 : i64, scratch_operands = 0 : i64, tpu.core_type = #tpu.core_type<tc>, window_params = [{pipeline_mode = #tpu.pipeline_mode<synchronous>, transform_indices = @transform_0, window_bounds = array<i64: 8, 32>}, {transform_indices = @transform_1, window_bounds = array<i64: 32, 256>}, {transform_indices = @transform_2, window_bounds = array<i64: 1, 256>}, {transform_indices = @transform_3, window_bounds = array<i64: 1, 256>}, {transform_indices = @transform_4, window_bounds = array<i64: 1, 256>}, {transform_indices = @transform_5, window_bounds = array<i64: 8, 256>}]} {
    %c0 = arith.constant 0 : index
    %c0_0 = arith.constant 0 : index
    %0 = vector.load %arg1[%c0, %c0_0] : memref<8x32xbf16, #tpu.memory_space<vmem>>, vector<8x32xbf16>
    %c0_1 = arith.constant 0 : index
    %c0_2 = arith.constant 0 : index
    %1 = vector.load %arg2[%c0_1, %c0_2] : memref<32x256xbf16, #tpu.memory_space<vmem>>, vector<32x256xbf16>
    %cst = arith.constant dense<0.000000e+00> : vector<8x256xf32>
    %2 = tpu.matmul %0, %1, %cst {dimension_numbers = #tpu.dot_dimension_numbers<[1], [0], [0], [1], [0, 0, 1, 1], [], []>} : vector<8x32xbf16>, vector<32x256xbf16>, vector<8x256xf32> -> vector<8x256xf32>
    %c0_3 = arith.constant 0 : index
    %c0_4 = arith.constant 0 : index
    %3 = vector.load %arg3[%c0_3, %c0_4] : memref<1x256xf32, #tpu.memory_space<vmem>>, vector<1x256xf32>
    %4 = vector.broadcast %3 : vector<1x256xf32> to vector<8x256xf32>
    %5 = arith.addf %2, %4 : vector<8x256xf32>
    %cst_5 = arith.constant 0.000000e+00 : f32
    %6 = vector.broadcast %cst_5 : f32 to vector<8x256xf32>
    %7 = arith.maximumf %5, %6 : vector<8x256xf32>
    %cst_6 = arith.constant dense<0.000000e+00> : vector<256xf32>
    %8 = vector.multi_reduction <add>, %7, %cst_6 [0] : vector<8x256xf32> to vector<256xf32>
    %9 = vector.shape_cast %8 : vector<256xf32> to vector<1x256xf32>
    %cst_7 = arith.constant 1.250000e-01 : f32
    %10 = vector.broadcast %cst_7 : f32 to vector<1x256xf32>
    %11 = arith.mulf %9, %10 : vector<1x256xf32>
    %12 = vector.broadcast %11 : vector<1x256xf32> to vector<8x256xf32>
    %13 = arith.subf %7, %12 : vector<8x256xf32>
    %14 = arith.mulf %13, %13 : vector<8x256xf32>
    %cst_8 = arith.constant dense<0.000000e+00> : vector<256xf32>
    %15 = vector.multi_reduction <add>, %14, %cst_8 [0] : vector<8x256xf32> to vector<256xf32>
    %16 = vector.shape_cast %15 : vector<256xf32> to vector<1x256xf32>
    %cst_9 = arith.constant 1.250000e-01 : f32
    %17 = vector.broadcast %cst_9 : f32 to vector<1x256xf32>
    %18 = arith.mulf %16, %17 : vector<1x256xf32>
    %c0_10 = arith.constant 0 : index
    %c0_11 = arith.constant 0 : index
    %19 = vector.load %arg4[%c0_10, %c0_11] : memref<1x256xf32, #tpu.memory_space<vmem>>, vector<1x256xf32>
    %cst_12 = arith.constant 9.99999974E-6 : f32
    %20 = vector.broadcast %cst_12 : f32 to vector<1x256xf32>
    %21 = arith.addf %18, %20 : vector<1x256xf32>
    %22 = math.rsqrt %21 : vector<1x256xf32>
    %23 = arith.mulf %19, %22 : vector<1x256xf32>
    %24 = vector.broadcast %23 : vector<1x256xf32> to vector<8x256xf32>
    %25 = arith.mulf %13, %24 : vector<8x256xf32>
    %c0_13 = arith.constant 0 : index
    %c0_14 = arith.constant 0 : index
    %26 = vector.load %arg5[%c0_13, %c0_14] : memref<1x256xf32, #tpu.memory_space<vmem>>, vector<1x256xf32>
    %27 = vector.broadcast %26 : vector<1x256xf32> to vector<8x256xf32>
    %28 = arith.addf %25, %27 : vector<8x256xf32>
    %c0_15 = arith.constant 0 : index
    %c0_16 = arith.constant 0 : index
    %29 = vector.load %arg6[%c0_15, %c0_16] : memref<8x256xf32, #tpu.memory_space<vmem>>, vector<8x256xf32>
    tpu.vector_store %arg6[%c0_15, %c0_16], %28 {strides = array<i32>} : memref<8x256xf32, #tpu.memory_space<vmem>>, vector<8x256xf32>,
    return
  }
  func.func @transform_0(%arg0: i32) -> (i32, i32) {
    %c0_i32 = arith.constant 0 : i32
    %c0_i32_0 = arith.constant 0 : i32
    %c0_i32_1 = arith.constant 0 : i32
    return %c0_i32, %c0_i32_0 : i32, i32
  }
  func.func @transform_1(%arg0: i32) -> (i32, i32) {
    %c0_i32 = arith.constant 0 : i32
    %c0_i32_0 = arith.constant 0 : i32
    return %c0_i32, %arg0 : i32, i32
  }
  func.func @transform_2(%arg0: i32) -> (i32, i32) {
    %c0_i32 = arith.constant 0 : i32
    %c0_i32_0 = arith.constant 0 : i32
    return %c0_i32, %arg0 : i32, i32
  }
  func.func @transform_3(%arg0: i32) -> (i32, i32) {
    %c0_i32 = arith.constant 0 : i32
    %c0_i32_0 = arith.constant 0 : i32
    return %c0_i32, %arg0 : i32, i32
  }
  func.func @transform_4(%arg0: i32) -> (i32, i32) {
    %c0_i32 = arith.constant 0 : i32
    %c0_i32_0 = arith.constant 0 : i32
    return %c0_i32, %arg0 : i32, i32
  }
  func.func @transform_5(%arg0: i32) -> (i32, i32) {
    %c0_i32 = arith.constant 0 : i32
    %c0_i32_0 = arith.constant 0 : i32
    return %c0_i32, %arg0 : i32, i32
  }
}

</mosaic_0001>

<llo_original>
// kernel: to_feature_map.1
$region0: #{to_feature_map.1}
  #allocation0 [shape = 'u32[]', space=smem, size = 0x4, offset = 0x4, fixed_abs, tag = 'smem constant byte address 0x4 - core index']
  #allocation1 [shape = 'u32[144,128]{1,0:T(1,128)}', space=vmem, size = 0x12000, scoped, tag = 'internal scratch']
  %s0 = inlined_call_operand.vmem [shape: bf16[8,32], index: 0, kind: input, shape index: {}]
  %s1 = inlined_call_operand.vmem [shape: bf16[32,256], index: 1, kind: input, shape index: {}]
  %s2 = inlined_call_operand.vmem [shape: f32[1,256], index: 2, kind: input, shape index: {}]
  %s3 = inlined_call_operand.vmem [shape: f32[1,256], index: 3, kind: input, shape index: {}]
  %s4 = inlined_call_operand.vmem [shape: f32[1,256], index: 4, kind: input, shape index: {}]
  %s5 = inlined_call_operand.vmem [shape: f32[8,256], index: 5, kind: output, shape index: {}]
  %s6 = sld [smem:[#allocation0]]
  $region30: #{to_feature_map.1} parent=0
    _
  %s8 = ssub.s32 1, %s6
  %s9 = scalar_select 0, %s8, %s6
  // Predicated region
  $region2: #{to_feature_map.1} parent=0 // pred_check
    _
  $region3: #{to_feature_map.1} parent=0 // pred_check_branch
    %11 = sbr.rel (0) target = $region5
  $region4: #{to_feature_map.1} parent=0 // pred_region
    _
  $region5: #{to_feature_map.1} parent=0 // pred_fallthru
    _
  // Predicated region
  $region6: #{to_feature_map.1} parent=0 // pred_check
    _
  $region7: #{to_feature_map.1} parent=0 // pred_check_branch
    %13 = sbr.rel (0) target = $region9
  $region8: #{to_feature_map.1} parent=0 // pred_region
    _
  $region9: #{to_feature_map.1} parent=0 // pred_fallthru
    _
  // Predicated region
  $region10: #{to_feature_map.1} parent=0 // pred_check
    _
  $region11: #{to_feature_map.1} parent=0 // pred_check_branch
    %15 = sbr.rel (0) target = $region13
  $region12: #{to_feature_map.1} parent=0 // pred_region
    _
  $region13: #{to_feature_map.1} parent=0 // pred_fallthru
    _
  // Predicated region
  $region14: #{to_feature_map.1} parent=0 // pred_check
    _
  $region15: #{to_feature_map.1} parent=0 // pred_check_branch
    %17 = sbr.rel (0) target = $region17
  $region16: #{to_feature_map.1} parent=0 // pred_region
    _
  $region17: #{to_feature_map.1} parent=0 // pred_fallthru
    _
  // Predicated region
  $region18: #{to_feature_map.1} parent=0 // pred_check
    _
  $region19: #{to_feature_map.1} parent=0 // pred_check_branch
    %19 = sbr.rel (0) target = $region21
  $region20: #{to_feature_map.1} parent=0 // pred_region
    _
  $region21: #{to_feature_map.1} parent=0 // pred_fallthru
    _
  %v21 = vld [vmem:[%s0] sm:$0xf]
  %v22 = vld [vmem:[%s1] sm:$0xff]
  %v23 = vld [vmem:[%s1 + $0x8] sm:$0xff]
  %v24 = vld [vmem:[%s1 + $0x10] sm:$0xff]
  %v25 = vld [vmem:[%s1 + $0x18] sm:$0xff]
  %v26 = vld [vmem:[%s2] sm:$0x3]
  %v28 = vlaneseq
  %v29 = vshrl.u32 %v28, 7
  %v30 = vsub.s32 0, %v29
  %v31 = vrot.slane %v26, %v30
  %v32 = vlaneseq
  %v33 = vshrl.u32 %v32, 7
  %v34 = vsub.s32 1, %v33
  %v35 = vrot.slane %v26, %v34
  %v42 = vunpack.c.l.b16 %v22
  %v43 = vunpack.c.h.b16 %v22
  %v44 = vunpack.c.l.b16 %v23
  %v45 = vunpack.c.h.b16 %v23
  %v46 = vunpack.c.l.b16 %v24
  %v47 = vunpack.c.h.b16 %v24
  %v48 = vunpack.c.l.b16 %v25
  %v49 = vunpack.c.h.b16 %v25
  %v50 = vpack.c.b16 %v44, %v42
  %v51 = vpack.c.b16 %v45, %v43
  %v52 = vpack.c.b16 %v48, %v46
  %v53 = vpack.c.b16 %v49, %v47
  %vm58 = vcmask 261120
  %v60 = vsel %vm58, %v21, 0
  %62 = vmatprep.subr.bf16.mxu0 %v51
  %63 = vmatpush1.bf16.msra.mxu0 %v50
  %64 = vmatprep.subr.bf16.mxu0 %v53
  %65 = vmatpush1.bf16.msra.mxu0 %v52
  %66 = vmatprep.subr.bf16.mxu0 0
  %67 = vmatpush1.bf16.msra.mxu0 0
  %68 = vmatprep.subr.bf16.mxu0 0
  %69 = vmatpush1.bf16.msra.mxu0 0
  %70 = vmatprep.subr.bf16.mxu0 0
  %71 = vmatpush1.bf16.msra.mxu0 0
  %72 = vmatprep.subr.bf16.mxu0 0
  %73 = vmatpush1.bf16.msra.mxu0 0
  %74 = vmatprep.subr.bf16.mxu0 0
  %75 = vmatpush1.bf16.msra.mxu0 0
  %76 = vmatprep.subr.bf16.mxu0 0
  %77 = vmatpush1.bf16.msra.mxu0 0
  %78 = vmatprep.subr.bf16.mxu0 0
  %79 = vmatpush1.bf16.msra.mxu0 0
  %80 = vmatprep.subr.bf16.mxu0 0
  %81 = vmatpush1.bf16.msra.mxu0 0
  %82 = vmatprep.subr.bf16.mxu0 0
  %83 = vmatpush1.bf16.msra.mxu0 0
  %84 = vmatprep.subr.bf16.mxu0 0
  %85 = vmatpush1.bf16.msra.mxu0 0
  %86 = vmatprep.subr.bf16.mxu0 0
  %87 = vmatpush1.bf16.msra.mxu0 0
  %88 = vmatprep.subr.bf16.mxu0 0
  %89 = vmatpush1.bf16.msra.mxu0 0
  %90 = vmatprep.subr.bf16.mxu0 0
  %91 = vmatpush1.bf16.msra.mxu0 0
  %92 = vmatprep.subr.bf16.mxu0 0
  %93 = vmatpush1.bf16.msra.mxu0 0
  %94 = vmatprep.mubr.bf16.mxu0 0
  %95 = vmatmul.mubr.bf16.gmra.mrb[0].mxu0 %v60
  %v96 = vpop.f32.mrb[0].mxu0
  %v97 = vadd.f32 %v31, %v96
  %v98 = vpop.f32.mrb[0].mxu0
  %v99 = vadd.f32 %v35, %v98
  %v100 = vpop.f32.mrb[0].mxu0
  %v101 = vpop.f32.mrb[0].mxu0
  %102 = vdwg.mxu0
  %v103 = vmax.f32 %v97, 0.0
  %v104 = vmax.f32 %v99, 0.0
  %v105 = vrot.slane %v103, 4
  %v106 = vadd.f32 %v103, %v105
  %v107 = vrot.slane %v106, 2
  %v108 = vadd.f32 %v106, %v107
  %v109 = vrot.slane %v108, 1
  %v110 = vadd.f32 %v108, %v109
  %v111 = vrot.slane %v104, 4
  %v112 = vadd.f32 %v104, %v111
  %v113 = vrot.slane %v112, 2
  %v114 = vadd.f32 %v112, %v113
  %v115 = vrot.slane %v114, 1
  %v116 = vadd.f32 %v114, %v115
  %v117 = vmul.f32 %v110, 0.125
  %v118 = vmul.f32 %v116, 0.125
  %v119 = vsub.f32 %v103, %v117
  %v120 = vsub.f32 %v104, %v118
  %v121 = vmul.f32 %v119, %v119
  %v122 = vmul.f32 %v120, %v120
  %v123 = vrot.slane %v121, 4
  %v124 = vadd.f32 %v121, %v123
  %v125 = vrot.slane %v124, 2
  %v126 = vadd.f32 %v124, %v125
  %v127 = vrot.slane %v126, 1
  %v128 = vadd.f32 %v126, %v127
  %v129 = vrot.slane %v122, 4
  %v130 = vadd.f32 %v122, %v129
  %v131 = vrot.slane %v130, 2
  %v132 = vadd.f32 %v130, %v131
  %v133 = vrot.slane %v132, 1
  %v134 = vadd.f32 %v132, %v133
  %v135 = vmul.f32 %v128, 0.125
  %v136 = vmul.f32 %v134, 0.125
  %v137 = vld [vmem:[%s3] sm:$0x3]
  %v138 = vadd.f32 %v135, 1e-05
  %v139 = vadd.f32 %v136, 1e-05
  %v140 = vrsqrt.pop %v138
  %v141 = vrsqrt.pop %v139
  %v144 = vcombine.low %v140, %v141
  %v146 = vunpack.c.l.s4 1966171168
  %v147 = vunpack.c.0.s8 %v146
  %v148 = vlaneseq
  %v149 = vshrl.u32 %v148, 7
  %v150 = vsub.s32 %v147, %v149
  %v151 = vrot.slane %v144, %v150
  %v153 = vunpack.c.l.s4 1966171168
  %v154 = vunpack.c.0.s8 %v153
  %v155 = vlaneseq
  %v156 = vshrl.u32 %v155, 7
  %v157 = vsub.s32 %v154, %v156
  %v158 = vrot.slane %v151, %v157
  %v160 = vmul.f32 %v137, %v158
  %v162 = vlaneseq
  %v163 = vshrl.u32 %v162, 7
  %v164 = vsub.s32 0, %v163
  %v165 = vrot.slane %v160, %v164
  %v166 = vlaneseq
  %v167 = vshrl.u32 %v166, 7
  %v168 = vsub.s32 1, %v167
  %v169 = vrot.slane %v160, %v168
  %v172 = vmul.f32 %v119, %v165
  %v173 = vmul.f32 %v120, %v169
  %v174 = vld [vmem:[%s4] sm:$0x3]
  %v176 = vlaneseq
  %v177 = vshrl.u32 %v176, 7
  %v178 = vsub.s32 0, %v177
  %v179 = vrot.slane %v174, %v178
  %v180 = vlaneseq
  %v181 = vshrl.u32 %v180, 7
  %v182 = vsub.s32 1, %v181
  %v183 = vrot.slane %v174, %v182
  %v186 = vadd.f32 %v172, %v179
  %v187 = vadd.f32 %v173, %v183
  %188 = vst [vmem:[%s5] sm:$0xff] %v186
  %189 = vst [vmem:[%s5 + $0x8] sm:$0xff] %v187
  // Predicated region
  $region22: #{to_feature_map.1} parent=0 // pred_check
    _
  $region23: #{to_feature_map.1} parent=0 // pred_check_branch
    %191 = sbr.rel (0) target = $region25
  $region24: #{to_feature_map.1} parent=0 // pred_region
    _
  $region25: #{to_feature_map.1} parent=0 // pred_fallthru
    _
  // Predicated region
  $region26: #{to_feature_map.1} parent=0 // pred_check
    _
  $region27: #{to_feature_map.1} parent=0 // pred_check_branch
    %193 = sbr.rel (0) target = $region29
  $region28: #{to_feature_map.1} parent=0 // pred_region
    _
  $region29: #{to_feature_map.1} parent=0 // pred_fallthru
    _

</llo_original>
